<compile_context>
chip_gen: v6e
topology: v6e:2x2x1
jax: 0.10.0
libtpu: 0.0.40
codegen_flags: <defaults>
</compile_context>

<pallas_src>
import functools

import jax
import jax.numpy as jnp
from jax import lax
from jax.experimental import pallas as pl
from jax.experimental.pallas import tpu as pltpu


def _contrastive_kernel(t_ref, e_ref, o_ref, *, gamma, clip_val, bt,
                        batch_size):
    # t_ref / e_ref blocks: (BT, S, Hp) ; o_ref block: (1, 1, 128) partial sum.
    chunk = pl.program_id(0)
    inv_gamma = jnp.float32(1.0 / gamma)
    eps2 = jnp.float32(1e-24)  # (1e-12)^2, matches F.normalize eps on the norm

    partial = jnp.float32(0.0)
    for j in range(bt):  # static unrolled loop over the batch sub-tile
        t = t_ref[j].astype(jnp.float32)   # (S, Hp) text latent
        e = e_ref[j].astype(jnp.float32)   # (S, Hp) eeg condition

        # F.normalize(x, dim=-1) == x * rsqrt(max(sum(x*x), eps^2))
        t_inv = lax.rsqrt(jnp.maximum(jnp.sum(t * t, axis=-1, keepdims=True),
                                      eps2))
        e_inv = lax.rsqrt(jnp.maximum(jnp.sum(e * e, axis=-1, keepdims=True),
                                      eps2))
        t_n = t * t_inv
        e_n = e * e_inv

        # similarity = (E @ T^T) / gamma, clamped; contraction on dim 1 of both
        # operands avoids materializing a transpose of t_n.
        sim = lax.dot_general(
            e_n, t_n,
            dimension_numbers=(((1,), (1,)), ((), ())),
            preferred_element_type=jnp.float32) * inv_gamma
        sim = jnp.clip(sim, -clip_val, clip_val)              # (S, S)

        # Cross-entropy with labels = arange(S):
        #   loss_i = logsumexp(sim_i) - sim_ii
        m = jnp.max(sim, axis=-1, keepdims=True)              # (S, 1)
        lse = m + jnp.log(jnp.sum(jnp.exp(sim - m), axis=-1,
                                  keepdims=True))             # (S, 1)

        # Diagonal directly as a row-dot (same clamp as the full matrix).
        diag = jnp.clip(jnp.sum(e_n * t_n, axis=-1, keepdims=True) * inv_gamma,
                        -clip_val, clip_val)                  # (S, 1)

        item = jnp.sum(lse - diag)
        # Mask batch rows that were zero-padded up to a multiple of BT.
        valid = (chunk * bt + j) < batch_size
        partial = partial + jnp.where(valid, item, jnp.float32(0.0))

    # Lane-dense write of this chunk's partial sum (no resident accumulator).
    o_ref[...] = jnp.full(o_ref.shape, partial, dtype=jnp.float32)


def contrastive_latent_loss(text_latent, eeg_condition, gamma=0.07,
                            clip_val=50.0, block_batch=8):
    """Pallas equivalent of ContrastiveLatentLoss.forward. Returns a scalar."""
    B, S, H = text_latent.shape

    # Lane-pad hidden dim to a multiple of 128 (zeros don't change the loss),
    # and pad batch to a multiple of the batch tile (padded rows are masked).
    Hp = pl.cdiv(H, 128) * 128
    bt = min(block_batch, B)
    num_chunks = pl.cdiv(B, bt)
    Bp = num_chunks * bt

    def _pad(x):
        return jnp.pad(x, ((0, Bp - B), (0, 0), (0, Hp - H)))

    tl = _pad(text_latent)
    ec = _pad(eeg_condition)

    # Size scoped VMEM: 2 inputs x double-buffered input tiles (+ headroom),
    # kept below v7x's 64 MiB physical VMEM.
    tile_bytes = bt * S * Hp * tl.dtype.itemsize
    vmem_limit = int(min(max(4 * tile_bytes + (8 << 20), 32 << 20), 56 << 20))

    kernel = functools.partial(_contrastive_kernel, gamma=gamma,
                               clip_val=clip_val, bt=bt, batch_size=B)

    out = pl.pallas_call(
        kernel,
        out_shape=jax.ShapeDtypeStruct((num_chunks, 1, 128), jnp.float32),
        grid_spec=pltpu.PrefetchScalarGridSpec(
            num_scalar_prefetch=0,
            grid=(num_chunks,),
            in_specs=[
                pl.BlockSpec((bt, S, Hp), lambda c: (c, 0, 0)),
                pl.BlockSpec((bt, S, Hp), lambda c: (c, 0, 0)),
            ],
            out_specs=pl.BlockSpec((1, 1, 128), lambda c: (c, 0, 0)),
        ),
        compiler_params=pltpu.CompilerParams(
            dimension_semantics=("parallel",),   # each chunk independent
            vmem_limit_bytes=vmem_limit),
    )(tl, ec)

    # Tiny reduction over per-chunk partial sums + normalization in JAX.
    return jnp.sum(out[:, 0, 0]) / jnp.float32(B * S)


def _reference_loss(text_latent, eeg_condition, gamma=0.07, clip_val=50.0):
    eps = 1e-12
    t = text_latent.astype(jnp.float32)
    e = eeg_condition.astype(jnp.float32)
    t_n = t / jnp.maximum(jnp.linalg.norm(t, axis=-1, keepdims=True), eps)
    e_n = e / jnp.maximum(jnp.linalg.norm(e, axis=-1, keepdims=True), eps)
    sim = jnp.einsum('bsh,bth->bst', e_n, t_n) / gamma
    sim = jnp.clip(sim, -clip_val, clip_val)
    lse = jax.nn.logsumexp(sim, axis=-1)                    # (B, S)
    diag = jnp.diagonal(sim, axis1=-2, axis2=-1)            # (B, S)
    return jnp.mean(lse - diag)


if __name__ == "__main__":
    key = jax.random.PRNGKey(0)
    k1, k2 = jax.random.split(key)
    B, S, H = 2, 8, 32
    text_latent = jax.random.normal(k1, (B, S, H), dtype=jnp.float32)
    eeg_condition = jax.random.normal(k2, (B, S, H), dtype=jnp.float32)

    loss = jax.jit(contrastive_latent_loss)(text_latent, eeg_condition)
    loss = jax.block_until_ready(loss)

    ref = _reference_loss(text_latent, eeg_condition)
    assert jnp.allclose(loss, ref, rtol=1e-3, atol=1e-3), (loss, ref)

    print("KERNEL_OK")
</pallas_src>

<mosaic_0001>
module attributes {stable_mosaic.version = 11 : i64} {
  func.func @_contrastive_kernel(%arg0: i32, %arg1: memref<2x8x128xf32, #tpu.memory_space<vmem>>, %arg2: memref<2x8x128xf32, #tpu.memory_space<vmem>>, %arg3: memref<1x1x128xf32, #tpu.memory_space<vmem>>) attributes {dimension_semantics = [#tpu.dimension_semantics<parallel>], iteration_bounds = array<i64: 1>, scalar_prefetch = 0 : i64, scratch_operands = 0 : i64, tpu.core_type = #tpu.core_type<tc>, window_params = [{transform_indices = @transform_0, window_bounds = array<i64: 2, 8, 128>}, {transform_indices = @transform_1, window_bounds = array<i64: 2, 8, 128>}, {transform_indices = @transform_2, window_bounds = array<i64: 1, 1, 128>}]} {
    %c0 = arith.constant 0 : index
    %c0_0 = arith.constant 0 : index
    %c0_1 = arith.constant 0 : index
    %0 = vector.load %arg1[%c0, %c0_0, %c0_1] : memref<2x8x128xf32, #tpu.memory_space<vmem>>, vector<1x8x128xf32>
    %1 = vector.shape_cast %0 : vector<1x8x128xf32> to vector<8x128xf32>
    %c0_2 = arith.constant 0 : index
    %c0_3 = arith.constant 0 : index
    %c0_4 = arith.constant 0 : index
    %2 = vector.load %arg2[%c0_2, %c0_3, %c0_4] : memref<2x8x128xf32, #tpu.memory_space<vmem>>, vector<1x8x128xf32>
    %3 = vector.shape_cast %2 : vector<1x8x128xf32> to vector<8x128xf32>
    %4 = arith.mulf %1, %1 : vector<8x128xf32>
    %cst = arith.constant dense<0.000000e+00> : vector<8xf32>
    %5 = vector.multi_reduction <add>, %4, %cst [1] : vector<8x128xf32> to vector<8xf32>
    %6 = vector.shape_cast %5 : vector<8xf32> to vector<8x1xf32>
    %cst_5 = arith.constant 1.000000e-24 : f32
    %7 = vector.broadcast %cst_5 : f32 to vector<8x1xf32>
    %8 = arith.maximumf %6, %7 : vector<8x1xf32>
    %9 = math.rsqrt %8 : vector<8x1xf32>
    %10 = arith.mulf %3, %3 : vector<8x128xf32>
    %cst_6 = arith.constant dense<0.000000e+00> : vector<8xf32>
    %11 = vector.multi_reduction <add>, %10, %cst_6 [1] : vector<8x128xf32> to vector<8xf32>
    %12 = vector.shape_cast %11 : vector<8xf32> to vector<8x1xf32>
    %cst_7 = arith.constant 1.000000e-24 : f32
    %13 = vector.broadcast %cst_7 : f32 to vector<8x1xf32>
    %14 = arith.maximumf %12, %13 : vector<8x1xf32>
    %15 = math.rsqrt %14 : vector<8x1xf32>
    %16 = vector.broadcast %9 : vector<8x1xf32> to vector<8x128xf32>
    %17 = arith.mulf %1, %16 : vector<8x128xf32>
    %18 = vector.broadcast %15 : vector<8x1xf32> to vector<8x128xf32>
    %19 = arith.mulf %3, %18 : vector<8x128xf32>
    %cst_8 = arith.constant dense<0.000000e+00> : vector<8x8xf32>
    %20 = tpu.matmul %19, %17, %cst_8 {dimension_numbers = #tpu.dot_dimension_numbers<[1], [1], [0], [0], [0, 0, 1, 0], [], []>} : vector<8x128xf32>, vector<8x128xf32>, vector<8x8xf32> -> vector<8x8xf32>
    %cst_9 = arith.constant 14.2857141 : f32
    %21 = vector.broadcast %cst_9 : f32 to vector<8x8xf32>
    %22 = arith.mulf %20, %21 : vector<8x8xf32>
    %cst_10 = arith.constant -5.000000e+01 : f32
    %cst_11 = arith.constant 5.000000e+01 : f32
    %23 = vector.broadcast %cst_10 : f32 to vector<8x8xf32>
    %24 = arith.maximumf %23, %22 : vector<8x8xf32>
    %25 = vector.broadcast %cst_11 : f32 to vector<8x8xf32>
    %26 = arith.minimumf %25, %24 : vector<8x8xf32>
    %cst_12 = arith.constant dense<0xFF800000> : vector<8xf32>
    %27 = vector.multi_reduction <maximumf>, %26, %cst_12 [1] : vector<8x8xf32> to vector<8xf32>
    %28 = vector.shape_cast %27 : vector<8xf32> to vector<8x1xf32>
    %29 = vector.broadcast %28 : vector<8x1xf32> to vector<8x8xf32>
    %30 = arith.subf %26, %29 : vector<8x8xf32>
    %31 = math.exp %30 : vector<8x8xf32>
    %cst_13 = arith.constant dense<0.000000e+00> : vector<8xf32>
    %32 = vector.multi_reduction <add>, %31, %cst_13 [1] : vector<8x8xf32> to vector<8xf32>
    %33 = vector.shape_cast %32 : vector<8xf32> to vector<8x1xf32>
    %34 = math.log %33 : vector<8x1xf32>
    %35 = arith.addf %28, %34 : vector<8x1xf32>
    %36 = arith.mulf %19, %17 : vector<8x128xf32>
    %cst_14 = arith.constant dense<0.000000e+00> : vector<8xf32>
    %37 = vector.multi_reduction <add>, %36, %cst_14 [1] : vector<8x128xf32> to vector<8xf32>
    %38 = vector.shape_cast %37 : vector<8xf32> to vector<8x1xf32>
    %cst_15 = arith.constant 14.2857141 : f32
    %39 = vector.broadcast %cst_15 : f32 to vector<8x1xf32>
    %40 = arith.mulf %38, %39 : vector<8x1xf32>
    %cst_16 = arith.constant -5.000000e+01 : f32
    %cst_17 = arith.constant 5.000000e+01 : f32
    %41 = vector.broadcast %cst_16 : f32 to vector<8x1xf32>
    %42 = arith.maximumf %41, %40 : vector<8x1xf32>
    %43 = vector.broadcast %cst_17 : f32 to vector<8x1xf32>
    %44 = arith.minimumf %43, %42 : vector<8x1xf32>
    %45 = arith.subf %35, %44 : vector<8x1xf32>
    %46 = vector.shape_cast %45 : vector<8x1xf32> to vector<1x8x1xf32>
    %cst_18 = arith.constant dense<0.000000e+00> : vector<1xf32>
    %47 = vector.multi_reduction <add>, %46, %cst_18 [1, 2] : vector<1x8x1xf32> to vector<1xf32>
    %48 = vector.shape_cast %47 : vector<1xf32> to vector<1x1x1xf32>
    %49 = vector.extract %48[0, 0, 0] : f32 from vector<1x1x1xf32>
    %c2_i32 = arith.constant 2 : i32
    %50 = arith.muli %arg0, %c2_i32 : i32
    %c0_i32 = arith.constant 0 : i32
    %51 = arith.addi %50, %c0_i32 : i32
    %c2_i32_19 = arith.constant 2 : i32
    %52 = arith.cmpi slt, %51, %c2_i32_19 : i32
    %cst_20 = arith.constant 0.000000e+00 : f32
    %53 = arith.select %52, %49, %cst_20 : f32
    %cst_21 = arith.constant 0.000000e+00 : f32
    %54 = arith.addf %cst_21, %53 : f32
    %c1 = arith.constant 1 : index
    %c0_22 = arith.constant 0 : index
    %c0_23 = arith.constant 0 : index
    %55 = vector.load %arg1[%c1, %c0_22, %c0_23] : memref<2x8x128xf32, #tpu.memory_space<vmem>>, vector<1x8x128xf32>
    %56 = vector.shape_cast %55 : vector<1x8x128xf32> to vector<8x128xf32>
    %c1_24 = arith.constant 1 : index
    %c0_25 = arith.constant 0 : index
    %c0_26 = arith.constant 0 : index
    %57 = vector.load %arg2[%c1_24, %c0_25, %c0_26] : memref<2x8x128xf32, #tpu.memory_space<vmem>>, vector<1x8x128xf32>
    %58 = vector.shape_cast %57 : vector<1x8x128xf32> to vector<8x128xf32>
    %59 = arith.mulf %56, %56 : vector<8x128xf32>
    %cst_27 = arith.constant dense<0.000000e+00> : vector<8xf32>
    %60 = vector.multi_reduction <add>, %59, %cst_27 [1] : vector<8x128xf32> to vector<8xf32>
    %61 = vector.shape_cast %60 : vector<8xf32> to vector<8x1xf32>
    %cst_28 = arith.constant 1.000000e-24 : f32
    %62 = vector.broadcast %cst_28 : f32 to vector<8x1xf32>
    %63 = arith.maximumf %61, %62 : vector<8x1xf32>
    %64 = math.rsqrt %63 : vector<8x1xf32>
    %65 = arith.mulf %58, %58 : vector<8x128xf32>
    %cst_29 = arith.constant dense<0.000000e+00> : vector<8xf32>
    %66 = vector.multi_reduction <add>, %65, %cst_29 [1] : vector<8x128xf32> to vector<8xf32>
    %67 = vector.shape_cast %66 : vector<8xf32> to vector<8x1xf32>
    %cst_30 = arith.constant 1.000000e-24 : f32
    %68 = vector.broadcast %cst_30 : f32 to vector<8x1xf32>
    %69 = arith.maximumf %67, %68 : vector<8x1xf32>
    %70 = math.rsqrt %69 : vector<8x1xf32>
    %71 = vector.broadcast %64 : vector<8x1xf32> to vector<8x128xf32>
    %72 = arith.mulf %56, %71 : vector<8x128xf32>
    %73 = vector.broadcast %70 : vector<8x1xf32> to vector<8x128xf32>
    %74 = arith.mulf %58, %73 : vector<8x128xf32>
    %cst_31 = arith.constant dense<0.000000e+00> : vector<8x8xf32>
    %75 = tpu.matmul %74, %72, %cst_31 {dimension_numbers = #tpu.dot_dimension_numbers<[1], [1], [0], [0], [0, 0, 1, 0], [], []>} : vector<8x128xf32>, vector<8x128xf32>, vector<8x8xf32> -> vector<8x8xf32>
    %cst_32 = arith.constant 14.2857141 : f32
    %76 = vector.broadcast %cst_32 : f32 to vector<8x8xf32>
    %77 = arith.mulf %75, %76 : vector<8x8xf32>
    %cst_33 = arith.constant -5.000000e+01 : f32
    %cst_34 = arith.constant 5.000000e+01 : f32
    %78 = vector.broadcast %cst_33 : f32 to vector<8x8xf32>
    %79 = arith.maximumf %78, %77 : vector<8x8xf32>
    %80 = vector.broadcast %cst_34 : f32 to vector<8x8xf32>
    %81 = arith.minimumf %80, %79 : vector<8x8xf32>
    %cst_35 = arith.constant dense<0xFF800000> : vector<8xf32>
    %82 = vector.multi_reduction <maximumf>, %81, %cst_35 [1] : vector<8x8xf32> to vector<8xf32>
    %83 = vector.shape_cast %82 : vector<8xf32> to vector<8x1xf32>
    %84 = vector.broadcast %83 : vector<8x1xf32> to vector<8x8xf32>
    %85 = arith.subf %81, %84 : vector<8x8xf32>
    %86 = math.exp %85 : vector<8x8xf32>
    %cst_36 = arith.constant dense<0.000000e+00> : vector<8xf32>
    %87 = vector.multi_reduction <add>, %86, %cst_36 [1] : vector<8x8xf32> to vector<8xf32>
    %88 = vector.shape_cast %87 : vector<8xf32> to vector<8x1xf32>
    %89 = math.log %88 : vector<8x1xf32>
    %90 = arith.addf %83, %89 : vector<8x1xf32>
    %91 = arith.mulf %74, %72 : vector<8x128xf32>
    %cst_37 = arith.constant dense<0.000000e+00> : vector<8xf32>
    %92 = vector.multi_reduction <add>, %91, %cst_37 [1] : vector<8x128xf32> to vector<8xf32>
    %93 = vector.shape_cast %92 : vector<8xf32> to vector<8x1xf32>
    %cst_38 = arith.constant 14.2857141 : f32
    %94 = vector.broadcast %cst_38 : f32 to vector<8x1xf32>
    %95 = arith.mulf %93, %94 : vector<8x1xf32>
    %cst_39 = arith.constant -5.000000e+01 : f32
    %cst_40 = arith.constant 5.000000e+01 : f32
    %96 = vector.broadcast %cst_39 : f32 to vector<8x1xf32>
    %97 = arith.maximumf %96, %95 : vector<8x1xf32>
    %98 = vector.broadcast %cst_40 : f32 to vector<8x1xf32>
    %99 = arith.minimumf %98, %97 : vector<8x1xf32>
    %100 = arith.subf %90, %99 : vector<8x1xf32>
    %101 = vector.shape_cast %100 : vector<8x1xf32> to vector<1x8x1xf32>
    %cst_41 = arith.constant dense<0.000000e+00> : vector<1xf32>
    %102 = vector.multi_reduction <add>, %101, %cst_41 [1, 2] : vector<1x8x1xf32> to vector<1xf32>
    %103 = vector.shape_cast %102 : vector<1xf32> to vector<1x1x1xf32>
    %104 = vector.extract %103[0, 0, 0] : f32 from vector<1x1x1xf32>
    %c2_i32_42 = arith.constant 2 : i32
    %105 = arith.muli %arg0, %c2_i32_42 : i32
    %c1_i32 = arith.constant 1 : i32
    %106 = arith.addi %105, %c1_i32 : i32
    %c2_i32_43 = arith.constant 2 : i32
    %107 = arith.cmpi slt, %106, %c2_i32_43 : i32
    %cst_44 = arith.constant 0.000000e+00 : f32
    %108 = arith.select %107, %104, %cst_44 : f32
    %109 = arith.addf %54, %108 : f32
    %110 = vector.broadcast %109 : f32 to vector<1x1x128xf32>
    %c0_45 = arith.constant 0 : index
    %c0_46 = arith.constant 0 : index
    %c0_47 = arith.constant 0 : index
    %111 = vector.load %arg3[%c0_45, %c0_46, %c0_47] : memref<1x1x128xf32, #tpu.memory_space<vmem>>, vector<1x1x128xf32>
    tpu.vector_store %arg3[%c0_45, %c0_46, %c0_47], %110 {strides = array<i32>} : memref<1x1x128xf32, #tpu.memory_space<vmem>>, vector<1x1x128xf32>,
    return
  }
  func.func @transform_0(%arg0: i32) -> (i32, i32, i32) {
    %c0_i32 = arith.constant 0 : i32
    %c0_i32_0 = arith.constant 0 : i32
    %c0_i32_1 = arith.constant 0 : i32
    return %arg0, %c0_i32, %c0_i32_0 : i32, i32, i32
  }
  func.func @transform_1(%arg0: i32) -> (i32, i32, i32) {
    %c0_i32 = arith.constant 0 : i32
    %c0_i32_0 = arith.constant 0 : i32
    %c0_i32_1 = arith.constant 0 : i32
    return %arg0, %c0_i32, %c0_i32_0 : i32, i32, i32
  }
  func.func @transform_2(%arg0: i32) -> (i32, i32, i32) {
    %c0_i32 = arith.constant 0 : i32
    %c0_i32_0 = arith.constant 0 : i32
    %c0_i32_1 = arith.constant 0 : i32
    return %arg0, %c0_i32, %c0_i32_0 : i32, i32, i32
  }
}

</mosaic_0001>

<llo_original>
// kernel: contrastive_latent_loss.1
$region0: #{contrastive_latent_loss.1}
  #allocation0 [shape = 'u32[]', space=smem, size = 0x4, offset = 0x4, fixed_abs, tag = 'smem constant byte address 0x4 - core index']
  #allocation1 [shape = 'u32[144,128]{1,0:T(1,128)}', space=vmem, size = 0x12000, scoped, tag = 'internal scratch']
  %s0 = inlined_call_operand.vmem [shape: f32[2,8,128], index: 0, kind: input, shape index: {}]
  %s1 = inlined_call_operand.vmem [shape: f32[2,8,128], index: 1, kind: input, shape index: {}]
  %s2 = inlined_call_operand.vmem [shape: f32[1,1,128], index: 2, kind: output, shape index: {}]
  %s3 = sld [smem:[#allocation0]]
  $region18: #{contrastive_latent_loss.1} parent=0
    _
  %s5 = ssub.s32 1, %s3
  %s6 = scalar_select 0, %s5, %s3
  // Predicated region
  $region2: #{contrastive_latent_loss.1} parent=0 // pred_check
    _
  $region3: #{contrastive_latent_loss.1} parent=0 // pred_check_branch
    %8 = sbr.rel (0) target = $region5
  $region4: #{contrastive_latent_loss.1} parent=0 // pred_region
    _
  $region5: #{contrastive_latent_loss.1} parent=0 // pred_fallthru
    _
  // Predicated region
  $region6: #{contrastive_latent_loss.1} parent=0 // pred_check
    _
  $region7: #{contrastive_latent_loss.1} parent=0 // pred_check_branch
    %10 = sbr.rel (0) target = $region9
  $region8: #{contrastive_latent_loss.1} parent=0 // pred_region
    _
  $region9: #{contrastive_latent_loss.1} parent=0 // pred_fallthru
    _
  %v11 = vld [vmem:[%s0] sm:$0xff]
  %v12 = vld [vmem:[%s1] sm:$0xff]
  %v13 = vmul.f32 %v11, %v11
  %14 = vadd.xlane.f32.xlu0 %v13
  %v15 = vpop.xlane.xlu0 %14
  %v16 = vmax.f32 %v15, 1e-24
  %v17 = vrsqrt.pop %v16
  %v18 = vmul.f32 %v12, %v12
  %19 = vadd.xlane.f32.xlu0 %v18
  %v20 = vpop.xlane.xlu0 %19
  %v21 = vmax.f32 %v20, 1e-24
  %v22 = vrsqrt.pop %v21
  %v23 = vmul.f32 %v11, %v17
  %v24 = vmul.f32 %v12, %v22
  %25 = vmatprep.subr.mxu0 0.0
  %26 = vmatpush1.xpose.msra.mxu0 0.0
  %27 = vmatprep.subr.mxu0 0.0
  %28 = vmatpush1.xpose.msra.mxu0 0.0
  %29 = vmatprep.subr.mxu0 0.0
  %30 = vmatpush1.xpose.msra.mxu0 0.0
  %31 = vmatprep.subr.mxu0 0.0
  %32 = vmatpush1.xpose.msra.mxu0 0.0
  %33 = vmatprep.subr.mxu0 0.0
  %34 = vmatpush1.xpose.msra.mxu0 0.0
  %35 = vmatprep.subr.mxu0 0.0
  %36 = vmatpush1.xpose.msra.mxu0 0.0
  %37 = vmatprep.subr.mxu0 0.0
  %38 = vmatpush1.xpose.msra.mxu0 0.0
  %39 = vmatprep.subr.mxu0 0.0
  %40 = vmatpush1.xpose.msra.mxu0 0.0
  %41 = vmatprep.subr.mxu0 0.0
  %42 = vmatpush1.xpose.msra.mxu0 0.0
  %43 = vmatprep.subr.mxu0 0.0
  %44 = vmatpush1.xpose.msra.mxu0 0.0
  %45 = vmatprep.subr.mxu0 0.0
  %46 = vmatpush1.xpose.msra.mxu0 0.0
  %47 = vmatprep.subr.mxu0 0.0
  %48 = vmatpush1.xpose.msra.mxu0 0.0
  %49 = vmatprep.subr.mxu0 0.0
  %50 = vmatpush1.xpose.msra.mxu0 0.0
  %51 = vmatprep.subr.mxu0 0.0
  %52 = vmatpush1.xpose.msra.mxu0 0.0
  %53 = vmatprep.subr.mxu0 0.0
  %54 = vmatpush1.xpose.msra.mxu0 0.0
  %55 = vmatprep.subr.mxu0 0.0
  %56 = vmatpush1.xpose.msra.mxu0 %v23
  %57 = vmatprep.subr.mxu0 0.0
  %58 = vmatpush2.xpose.msra.mxu0 0.0
  %59 = vmatprep.subr.mxu0 0.0
  %60 = vmatpush2.xpose.msra.mxu0 0.0
  %61 = vmatprep.subr.mxu0 0.0
  %62 = vmatpush2.xpose.msra.mxu0 0.0
  %63 = vmatprep.subr.mxu0 0.0
  %64 = vmatpush2.xpose.msra.mxu0 0.0
  %65 = vmatprep.subr.mxu0 0.0
  %66 = vmatpush2.xpose.msra.mxu0 0.0
  %67 = vmatprep.subr.mxu0 0.0
  %68 = vmatpush2.xpose.msra.mxu0 0.0
  %69 = vmatprep.subr.mxu0 0.0
  %70 = vmatpush2.xpose.msra.mxu0 0.0
  %71 = vmatprep.subr.mxu0 0.0
  %72 = vmatpush2.xpose.msra.mxu0 0.0
  %73 = vmatprep.subr.mxu0 0.0
  %74 = vmatpush2.xpose.msra.mxu0 0.0
  %75 = vmatprep.subr.mxu0 0.0
  %76 = vmatpush2.xpose.msra.mxu0 0.0
  %77 = vmatprep.subr.mxu0 0.0
  %78 = vmatpush2.xpose.msra.mxu0 0.0
  %79 = vmatprep.subr.mxu0 0.0
  %80 = vmatpush2.xpose.msra.mxu0 0.0
  %81 = vmatprep.subr.mxu0 0.0
  %82 = vmatpush2.xpose.msra.mxu0 0.0
  %83 = vmatprep.subr.mxu0 0.0
  %84 = vmatpush2.xpose.msra.mxu0 0.0
  %85 = vmatprep.subr.mxu0 0.0
  %86 = vmatpush2.xpose.msra.mxu0 0.0
  %87 = vmatprep.subr.mxu0 0.0
  %88 = vmatpush2.xpose.msra.mxu0 0.0
  %89 = vmatprep.mubr.f32.mxu0 0.0
  %90 = vmatmul.mubr.f32.gmra.mxu0 %v24
  %v91 = vpop.f32.mrf.mxu0
  %v92 = vadd.f32 0.0, %v91
  %v93 = vpop.f32.mrf.mxu0
  %94 = vdwg.mxu0
  %v95 = vmul.f32 %v92, 14.285714
  %v96 = vmax.f32 %v95, -50.0
  %v97 = vmin.f32 %v96, 50.0
  %vm98 = vcmask 64512
  %v99 = vsel %vm98, %v97, -inf
  %100 = vmax.xlane.f32.xlu0 %v99
  %v101 = vpop.xlane.xlu0 %100
  %v102 = vsub.f32 %v97, %v101
  %v103 = vmul.f32 %v102, 1.442695
  %v104 = vpow.pop %v103
  %v105 = vsel %vm98, %v104, 0.0
  %106 = vadd.xlane.f32.xlu0 %v105
  %v107 = vpop.xlane.xlu0 %106
  %v108 = vlog2.pop %v107
  %v109 = vmul.f32 %v108, 0.6931472
  %v110 = vadd.f32 %v101, %v109
  %v111 = vmul.f32 %v24, %v23
  %112 = vadd.xlane.f32.xlu0 %v111
  %v113 = vpop.xlane.xlu0 %112
  %v114 = vmul.f32 %v113, 14.285714
  %v115 = vmax.f32 %v114, -50.0
  %v116 = vmin.f32 %v115, 50.0
  %v117 = vsub.f32 %v110, %v116
  %vm118 = vcmask 7168
  %v119 = vsel %vm118, %v117, 0.0
  %120 = vadd.xlane.f32.xlu0 %v119
  %v121 = vpop.xlane.xlu0 %120
  %v122 = vrot.slane %v121, 4
  %v123 = vadd.f32 %v121, %v122
  %v124 = vrot.slane %v123, 2
  %v125 = vadd.f32 %v123, %v124
  %v126 = vrot.slane %v125, 1
  %v127 = vadd.f32 %v125, %v126
  %s128 = vtos %v127
  %s129 = smul.u32 0, 2
  %p130 = scmp.lt.s32.totalorder %s129, 2
  %s131 = scalar_select %p130, %s128, 0.0
  %s132 = sadd.f32 %s131, 0.0
  %s133 = scalar_lea.vmem %s0, 8
  %v134 = vld [vmem:[%s133] sm:$0xff]
  %s135 = scalar_lea.vmem %s1, 8
  %v136 = vld [vmem:[%s135] sm:$0xff]
  %v137 = vmul.f32 %v134, %v134
  %138 = vadd.xlane.f32.xlu0 %v137
  %v139 = vpop.xlane.xlu0 %138
  %v140 = vmax.f32 %v139, 1e-24
  %v141 = vrsqrt.pop %v140
  %v142 = vmul.f32 %v136, %v136
  %143 = vadd.xlane.f32.xlu0 %v142
  %v144 = vpop.xlane.xlu0 %143
  %v145 = vmax.f32 %v144, 1e-24
  %v146 = vrsqrt.pop %v145
  %v147 = vmul.f32 %v134, %v141
  %v148 = vmul.f32 %v136, %v146
  %149 = vmatprep.subr.mxu0 0.0
  %150 = vmatpush1.xpose.msra.mxu0 0.0
  %151 = vmatprep.subr.mxu0 0.0
  %152 = vmatpush1.xpose.msra.mxu0 0.0
  %153 = vmatprep.subr.mxu0 0.0
  %154 = vmatpush1.xpose.msra.mxu0 0.0
  %155 = vmatprep.subr.mxu0 0.0
  %156 = vmatpush1.xpose.msra.mxu0 0.0
  %157 = vmatprep.subr.mxu0 0.0
  %158 = vmatpush1.xpose.msra.mxu0 0.0
  %159 = vmatprep.subr.mxu0 0.0
  %160 = vmatpush1.xpose.msra.mxu0 0.0
  %161 = vmatprep.subr.mxu0 0.0
  %162 = vmatpush1.xpose.msra.mxu0 0.0
  %163 = vmatprep.subr.mxu0 0.0
  %164 = vmatpush1.xpose.msra.mxu0 0.0
  %165 = vmatprep.subr.mxu0 0.0
  %166 = vmatpush1.xpose.msra.mxu0 0.0
  %167 = vmatprep.subr.mxu0 0.0
  %168 = vmatpush1.xpose.msra.mxu0 0.0
  %169 = vmatprep.subr.mxu0 0.0
  %170 = vmatpush1.xpose.msra.mxu0 0.0
  %171 = vmatprep.subr.mxu0 0.0
  %172 = vmatpush1.xpose.msra.mxu0 0.0
  %173 = vmatprep.subr.mxu0 0.0
  %174 = vmatpush1.xpose.msra.mxu0 0.0
  %175 = vmatprep.subr.mxu0 0.0
  %176 = vmatpush1.xpose.msra.mxu0 0.0
  %177 = vmatprep.subr.mxu0 0.0
  %178 = vmatpush1.xpose.msra.mxu0 0.0
  %179 = vmatprep.subr.mxu0 0.0
  %180 = vmatpush1.xpose.msra.mxu0 %v147
  %181 = vmatprep.subr.mxu0 0.0
  %182 = vmatpush2.xpose.msra.mxu0 0.0
  %183 = vmatprep.subr.mxu0 0.0
  %184 = vmatpush2.xpose.msra.mxu0 0.0
  %185 = vmatprep.subr.mxu0 0.0
  %186 = vmatpush2.xpose.msra.mxu0 0.0
  %187 = vmatprep.subr.mxu0 0.0
  %188 = vmatpush2.xpose.msra.mxu0 0.0
  %189 = vmatprep.subr.mxu0 0.0
  %190 = vmatpush2.xpose.msra.mxu0 0.0
  %191 = vmatprep.subr.mxu0 0.0
  %192 = vmatpush2.xpose.msra.mxu0 0.0
  %193 = vmatprep.subr.mxu0 0.0
  %194 = vmatpush2.xpose.msra.mxu0 0.0
  %195 = vmatprep.subr.mxu0 0.0
  %196 = vmatpush2.xpose.msra.mxu0 0.0
  %197 = vmatprep.subr.mxu0 0.0
  %198 = vmatpush2.xpose.msra.mxu0 0.0
  %199 = vmatprep.subr.mxu0 0.0
  %200 = vmatpush2.xpose.msra.mxu0 0.0
  %201 = vmatprep.subr.mxu0 0.0
  %202 = vmatpush2.xpose.msra.mxu0 0.0
  %203 = vmatprep.subr.mxu0 0.0
  %204 = vmatpush2.xpose.msra.mxu0 0.0
  %205 = vmatprep.subr.mxu0 0.0
  %206 = vmatpush2.xpose.msra.mxu0 0.0
  %207 = vmatprep.subr.mxu0 0.0
  %208 = vmatpush2.xpose.msra.mxu0 0.0
  %209 = vmatprep.subr.mxu0 0.0
  %210 = vmatpush2.xpose.msra.mxu0 0.0
  %211 = vmatprep.subr.mxu0 0.0
  %212 = vmatpush2.xpose.msra.mxu0 0.0
  %213 = vmatprep.mubr.f32.mxu0 0.0
  %214 = vmatmul.mubr.f32.gmra.mxu0 %v148
  %v215 = vpop.f32.mrf.mxu0
  %v216 = vadd.f32 0.0, %v215
  %v217 = vpop.f32.mrf.mxu0
  %218 = vdwg.mxu0
  %v219 = vmul.f32 %v216, 14.285714
  %v220 = vmax.f32 %v219, -50.0
  %v221 = vmin.f32 %v220, 50.0
  %v222 = vsel %vm98, %v221, -inf
  %223 = vmax.xlane.f32.xlu0 %v222
  %v224 = vpop.xlane.xlu0 %223
  %v225 = vsub.f32 %v221, %v224
  %v226 = vmul.f32 %v225, 1.442695
  %v227 = vpow.pop %v226
  %v228 = vsel %vm98, %v227, 0.0
  %229 = vadd.xlane.f32.xlu0 %v228
  %v230 = vpop.xlane.xlu0 %229
  %v231 = vlog2.pop %v230
  %v232 = vmul.f32 %v231, 0.6931472
  %v233 = vadd.f32 %v224, %v232
  %v234 = vmul.f32 %v148, %v147
  %235 = vadd.xlane.f32.xlu0 %v234
  %v236 = vpop.xlane.xlu0 %235
  %v237 = vmul.f32 %v236, 14.285714
  %v238 = vmax.f32 %v237, -50.0
  %v239 = vmin.f32 %v238, 50.0
  %v240 = vsub.f32 %v233, %v239
  %v241 = vsel %vm118, %v240, 0.0
  %242 = vadd.xlane.f32.xlu0 %v241
  %v243 = vpop.xlane.xlu0 %242
  %v244 = vrot.slane %v243, 4
  %v245 = vadd.f32 %v243, %v244
  %v246 = vrot.slane %v245, 2
  %v247 = vadd.f32 %v245, %v246
  %v248 = vrot.slane %v247, 1
  %v249 = vadd.f32 %v247, %v248
  %s250 = vtos %v249
  %s251 = sadd.s32 %s129, 1
  %p252 = scmp.lt.s32.totalorder %s251, 2
  %s253 = scalar_select %p252, %s250, 0.0
  %s254 = sadd.f32 %s132, %s253
  %v255 = vstv %s254
  %256 = vst [vmem:[%s2] sm:$0x1] %v255
  // Predicated region
  $region10: #{contrastive_latent_loss.1} parent=0 // pred_check
    _
  $region11: #{contrastive_latent_loss.1} parent=0 // pred_check_branch
    %258 = sbr.rel (0) target = $region13
  $region12: #{contrastive_latent_loss.1} parent=0 // pred_region
    _
  $region13: #{contrastive_latent_loss.1} parent=0 // pred_fallthru
    _
  // Predicated region
  $region14: #{contrastive_latent_loss.1} parent=0 // pred_check
    _
  $region15: #{contrastive_latent_loss.1} parent=0 // pred_check_branch
    %260 = sbr.rel (0) target = $region17
  $region16: #{contrastive_latent_loss.1} parent=0 // pred_region
    _
  $region17: #{contrastive_latent_loss.1} parent=0 // pred_fallthru
    _

</llo_original>
